<compile_context>
chip_gen: v7x
topology: tpu7x:2x2x1
jax: 0.10.0
libtpu: 0.0.40
codegen_flags: <defaults>
</compile_context>

<pallas_src>
import jax
import jax.numpy as jnp
from jax.experimental import pallas as pl
from jax.experimental.pallas import tpu as pltpu


def _fusion_kernel(x_ref, w_ref, b_ref, o_ref):
    # One MXU matmul per M-tile: (tm, G*K) @ (G*K, G*O), f32 accumulate,
    # bias add on the VPU, cast to the output dtype on store.
    acc = jnp.dot(x_ref[...], w_ref[...], preferred_element_type=jnp.float32)
    o_ref[...] = (acc + b_ref[...]).astype(o_ref.dtype)


def _pick_group(m):
    # Largest row-group in {8,4,2,1} dividing M.  G=8 makes x loads a full
    # 128-lane vreg (K=16) and output stores two full vregs wide (O=32).
    for g in (8, 4, 2, 1):
        if m % g == 0:
            return g
    return 1


def _pick_tile(mg, target):
    # Largest M-tile <= target that divides Mg and is a multiple of 8, else
    # fall back to the full slab (a full-extent block is always legal).
    if mg <= target:
        return mg
    for t in range(target - target % 8, 7, -8):
        if mg % t == 0:
            return t
    return mg


def sensor_fusion(x, weight, bias, output_embed_dim, *, tile_rows=512):
    """x: (B, F, L, S); weight: (O, F*S); bias: (O,)  ->  (B, L, O)."""
    B, F, L, S = x.shape
    M, K, O = B * L, F * S, output_embed_dim
    assert weight.shape == (O, K) and bias.shape == (O,)

    G = _pick_group(M)
    Mg, Kg, Og = M // G, G * K, G * O

    # Free row-major bitcasts: (B,F,L,S) -> (M,K) -> (Mg, G*K).
    xg = x.reshape(Mg, Kg)
    # Block-diagonal weight folds the row-grouping AND the transpose into one
    # tiny constant (128x256 f32 = 128 KiB at default shapes); it stays
    # resident in VMEM for the whole grid.  Bias is tiled to match.
    wg = jnp.kron(jnp.eye(G, dtype=weight.dtype), weight.T)   # (Kg, Og)
    bg = jnp.tile(bias, G).reshape(1, Og)                     # (1, Og)

    tm = _pick_tile(Mg, tile_rows)
    grid = (Mg // tm,)

    out = pl.pallas_call(
        _fusion_kernel,
        out_shape=jax.ShapeDtypeStruct((Mg, Og), x.dtype),
        grid_spec=pltpu.PrefetchScalarGridSpec(
            num_scalar_prefetch=0,
            grid=grid,
            in_specs=[
                pl.BlockSpec((tm, Kg), lambda i: (i, 0)),   # streamed x tiles
                pl.BlockSpec((Kg, Og), lambda i: (0, 0)),   # resident weight
                pl.BlockSpec((1, Og), lambda i: (0, 0)),    # resident bias
            ],
            out_specs=pl.BlockSpec((tm, Og), lambda i: (i, 0)),
        ),
        compiler_params=pltpu.CompilerParams(
            # Independent M tiles: shard across both TensorCores on v7x.
            dimension_semantics=("parallel",),
        ),
    )(xg, wg, bg)

    # Free bitcast back: (Mg, G*O) row-major == (M, O) row-major == (B, L, O).
    return out.reshape(B, L, O)


if __name__ == "__main__":
    # Module hyper-params (small, consistent with the forward pass):
    input_embed_dim = 4      # F (num_filters)
    num_sensors = 4          # S
    output_embed_dim = 32    # O
    B, L = 2, 16             # batch, length  ->  M = 32

    key = jax.random.PRNGKey(0)
    kx, kw, kb = jax.random.split(key, 3)
    fan_in = input_embed_dim * num_sensors

    x = jax.random.normal(kx, (B, input_embed_dim, L, num_sensors), dtype=jnp.float32)
    # nn.Linear(input_embed_dim * num_sensors, output_embed_dim) parameters:
    weight = jax.random.normal(kw, (output_embed_dim, fan_in), dtype=jnp.float32) * 0.1
    bias = jax.random.normal(kb, (output_embed_dim,), dtype=jnp.float32) * 0.1

    y = jax.block_until_ready(sensor_fusion(x, weight, bias, output_embed_dim))

    # Pure-JAX reference replicating the PyTorch forward exactly (literal view).
    y_ref = (x.reshape(B * L, fan_in) @ weight.T + bias).reshape(B, L, output_embed_dim)
    assert y.shape == (B, L, output_embed_dim)
    assert jnp.allclose(y, y_ref, atol=1e-5, rtol=1e-5), float(jnp.abs(y - y_ref).max())

    # Second check exercises the multi-tile gridded path (Mg=16, tm=8, grid=(2,)).
    B2, L2 = 2, 64
    x2 = jax.random.normal(kx, (B2, input_embed_dim, L2, num_sensors), dtype=jnp.float32)
    y2 = jax.block_until_ready(
        sensor_fusion(x2, weight, bias, output_embed_dim, tile_rows=8))
    y2_ref = (x2.reshape(B2 * L2, fan_in) @ weight.T + bias).reshape(
        B2, L2, output_embed_dim)
    assert jnp.allclose(y2, y2_ref, atol=1e-5, rtol=1e-5), float(jnp.abs(y2 - y2_ref).max())

    print("KERNEL_OK")
</pallas_src>

<mosaic_0001>
module attributes {stable_mosaic.version = 11 : i64} {
  func.func @_fusion_kernel(%arg0: i32, %arg1: memref<4x128xf32, #tpu.memory_space<vmem>>, %arg2: memref<128x256xf32, #tpu.memory_space<vmem>>, %arg3: memref<1x256xf32, #tpu.memory_space<vmem>>, %arg4: memref<4x256xf32, #tpu.memory_space<vmem>>) attributes {dimension_semantics = [#tpu.dimension_semantics<parallel>], iteration_bounds = array<i64: 1>, scalar_prefetch = 0 : i64, scratch_operands = 0 : i64, tpu.core_type = #tpu.core_type<tc>, window_params = [{transform_indices = @transform_0, window_bounds = array<i64: 4, 128>}, {pipeline_mode = #tpu.pipeline_mode<synchronous>, transform_indices = @transform_1, window_bounds = array<i64: 128, 256>}, {pipeline_mode = #tpu.pipeline_mode<synchronous>, transform_indices = @transform_2, window_bounds = array<i64: 1, 256>}, {transform_indices = @transform_3, window_bounds = array<i64: 4, 256>}]} {
    %c0 = arith.constant 0 : index
    %c0_0 = arith.constant 0 : index
    %0 = vector.load %arg1[%c0, %c0_0] : memref<4x128xf32, #tpu.memory_space<vmem>>, vector<4x128xf32>
    %c0_1 = arith.constant 0 : index
    %c0_2 = arith.constant 0 : index
    %1 = vector.load %arg2[%c0_1, %c0_2] : memref<128x256xf32, #tpu.memory_space<vmem>>, vector<128x256xf32>
    %cst = arith.constant dense<0.000000e+00> : vector<4x256xf32>
    %2 = tpu.matmul %0, %1, %cst {dimension_numbers = #tpu.dot_dimension_numbers<[1], [0], [0], [1], [0, 0, 1, 1], [], []>} : vector<4x128xf32>, vector<128x256xf32>, vector<4x256xf32> -> vector<4x256xf32>
    %c0_3 = arith.constant 0 : index
    %c0_4 = arith.constant 0 : index
    %3 = vector.load %arg3[%c0_3, %c0_4] : memref<1x256xf32, #tpu.memory_space<vmem>>, vector<1x256xf32>
    %4 = vector.broadcast %3 : vector<1x256xf32> to vector<4x256xf32>
    %5 = arith.addf %2, %4 : vector<4x256xf32>
    %c0_5 = arith.constant 0 : index
    %c0_6 = arith.constant 0 : index
    %6 = vector.load %arg4[%c0_5, %c0_6] : memref<4x256xf32, #tpu.memory_space<vmem>>, vector<4x256xf32>
    tpu.vector_store %arg4[%c0_5, %c0_6], %5 {strides = array<i32>} : memref<4x256xf32, #tpu.memory_space<vmem>>, vector<4x256xf32>,
    return
  }
  func.func @transform_0(%arg0: i32) -> (i32, i32) {
    %c0_i32 = arith.constant 0 : i32
    %c0_i32_0 = arith.constant 0 : i32
    return %arg0, %c0_i32 : i32, i32
  }
  func.func @transform_1(%arg0: i32) -> (i32, i32) {
    %c0_i32 = arith.constant 0 : i32
    %c0_i32_0 = arith.constant 0 : i32
    %c0_i32_1 = arith.constant 0 : i32
    return %c0_i32, %c0_i32_0 : i32, i32
  }
  func.func @transform_2(%arg0: i32) -> (i32, i32) {
    %c0_i32 = arith.constant 0 : i32
    %c0_i32_0 = arith.constant 0 : i32
    %c0_i32_1 = arith.constant 0 : i32
    return %c0_i32, %c0_i32_0 : i32, i32
  }
  func.func @transform_3(%arg0: i32) -> (i32, i32) {
    %c0_i32 = arith.constant 0 : i32
    %c0_i32_0 = arith.constant 0 : i32
    return %arg0, %c0_i32 : i32, i32
  }
}

</mosaic_0001>

<llo_original>
// kernel: tpu_custom_call.1
$region0: #{tpu_custom_call.1}
  #allocation0 [shape = 'u32[]', space=smem, size = 0x4, offset = 0x4, fixed_abs, tag = 'smem constant byte address 0x4 - core index']
  #allocation1 [shape = 'u32[144,128]{1,0:T(1,128)}', space=vmem, size = 0x12000, scoped, tag = 'internal scratch']
  %s0 = inlined_call_operand.hbm [shape: f32[4,128], index: 0, kind: input, shape index: {}]
  %s1 = inlined_call_operand.hbm [shape: f32[128,256], index: 1, kind: input, shape index: {}]
  %s2 = inlined_call_operand.vmem [shape: f32[1,256], index: 2, kind: input, shape index: {}]
  %s3 = inlined_call_operand.hbm [shape: f32[4,256], index: 3, kind: output, shape index: {}]
  %s4 = sld [smem:[#allocation0]]
  $region30: #{tpu_custom_call.1} parent=0
    _
  %s6 = ssub.s32 1, %s4
  %s7 = scalar_select 0, %s6, %s4
  $region1: #{tpu_custom_call.1} parent=0
    #allocation2 [shape = 'u8[2048]{0}', space=vmem, size = 0x800, scoped, tag = 'input window, operand 0, single buffered']
    #allocation3 [shape = 's32[1]{0}', space=sflag, size = 0x4, scoped, tag = 'scoped memory for tpu_custom_call.1']
    #allocation4 [shape = 's32[1]{0}', space=sflag, size = 0x4, scoped, tag = 'scoped memory for tpu_custom_call.1']
    #allocation5 [shape = 'u8[131072]{0}', space=vmem, size = 0x20000, scoped, tag = 'input window, operand 1, single buffered']
    #allocation6 [shape = 's32[1]{0}', space=sflag, size = 0x4, scoped, tag = 'scoped memory for tpu_custom_call.1']
    #allocation7 [shape = 'u8[4096]{0}', space=vmem, size = 0x1000, scoped, tag = 'output window, operand 0, single buffered']
    %8 = vsyncpa [#allocation3], 0
    %9 = vsyncpa [#allocation6], 0
    %10 = vsyncpa [#allocation4], 0
    // Predicated region
    $region2: #{tpu_custom_call.1} parent=1 // pred_check
      _
    $region3: #{tpu_custom_call.1} parent=1 // pred_check_branch
      %12 = sbr.rel (0) target = $region5
    $region4: #{tpu_custom_call.1} parent=1 // pred_region
      %s14 = ssub.s32 64, 64
      %15 = vsyncadd [#allocation3], %s14
      %s17 = sshll.u32 [#allocation2], 4
      %s18 = int_to_ptr.vmem [resolvable:$true] %s17
      %20 = dma.hbm_to_vmem [thread:$0]  %s0, 64, %s18, [#allocation3]
    $region5: #{tpu_custom_call.1} parent=1 // pred_fallthru
      _
    // Predicated region
    $region6: #{tpu_custom_call.1} parent=1 // pred_check
      _
    $region7: #{tpu_custom_call.1} parent=1 // pred_check_branch
      %22 = sbr.rel (0) target = $region9
    $region8: #{tpu_custom_call.1} parent=1 // pred_region
      %s24 = ssub.s32 4096, 4096
      %25 = vsyncadd [#allocation6], %s24
      %s26 = sshll.u32 [#allocation5], 4
      %s27 = int_to_ptr.vmem [resolvable:$true] %s26
      %32 = dma.hbm_to_vmem [thread:$0]  %s1, 4096, %s27, [#allocation6], 256, 256, 16
    $region9: #{tpu_custom_call.1} parent=1 // pred_fallthru
      _
    // Predicated region
    $region10: #{tpu_custom_call.1} parent=1 // pred_check
      _
    $region11: #{tpu_custom_call.1} parent=1 // pred_check_branch
      %34 = sbr.rel (0) target = $region13
    $region12: #{tpu_custom_call.1} parent=1 // pred_region
      _
    $region13: #{tpu_custom_call.1} parent=1 // pred_fallthru
      _
    // Predicated region
    $region14: #{tpu_custom_call.1} parent=1 // pred_check
      _
    $region15: #{tpu_custom_call.1} parent=1 // pred_check_branch
      %36 = sbr.rel (0) target = $region17
    $region16: #{tpu_custom_call.1} parent=1 // pred_region
      %37 = dma.done [#allocation3], 64
    $region17: #{tpu_custom_call.1} parent=1 // pred_fallthru
      _
    // Predicated region
    $region18: #{tpu_custom_call.1} parent=1 // pred_check
      _
    $region19: #{tpu_custom_call.1} parent=1 // pred_check_branch
      %39 = sbr.rel (0) target = $region21
    $region20: #{tpu_custom_call.1} parent=1 // pred_region
      %40 = dma.done [#allocation6], 4096
    $region21: #{tpu_custom_call.1} parent=1 // pred_fallthru
      _
    %v41 = vld [vmem:[#allocation2] sm:$0xf]
    %v42 = vld [vmem:[#allocation5] sm:$0xff]
    %v43 = vld [vmem:[#allocation5 + $0x8] sm:$0xff]
    %v44 = vld [vmem:[#allocation5 + $0x10] sm:$0xff]
    %v45 = vld [vmem:[#allocation5 + $0x18] sm:$0xff]
    %v46 = vld [vmem:[#allocation5 + $0x20] sm:$0xff]
    %v47 = vld [vmem:[#allocation5 + $0x28] sm:$0xff]
    %v48 = vld [vmem:[#allocation5 + $0x30] sm:$0xff]
    %v49 = vld [vmem:[#allocation5 + $0x38] sm:$0xff]
    %v50 = vld [vmem:[#allocation5 + $0x40] sm:$0xff]
    %v51 = vld [vmem:[#allocation5 + $0x48] sm:$0xff]
    %v52 = vld [vmem:[#allocation5 + $0x50] sm:$0xff]
    %v53 = vld [vmem:[#allocation5 + $0x58] sm:$0xff]
    %v54 = vld [vmem:[#allocation5 + $0x60] sm:$0xff]
    %v55 = vld [vmem:[#allocation5 + $0x68] sm:$0xff]
    %v56 = vld [vmem:[#allocation5 + $0x70] sm:$0xff]
    %v57 = vld [vmem:[#allocation5 + $0x78] sm:$0xff]
    %v58 = vld [vmem:[#allocation5 + $0x80] sm:$0xff]
    %v59 = vld [vmem:[#allocation5 + $0x88] sm:$0xff]
    %v60 = vld [vmem:[#allocation5 + $0x90] sm:$0xff]
    %v61 = vld [vmem:[#allocation5 + $0x98] sm:$0xff]
    %v62 = vld [vmem:[#allocation5 + $0xa0] sm:$0xff]
    %v63 = vld [vmem:[#allocation5 + $0xa8] sm:$0xff]
    %v64 = vld [vmem:[#allocation5 + $0xb0] sm:$0xff]
    %v65 = vld [vmem:[#allocation5 + $0xb8] sm:$0xff]
    %v66 = vld [vmem:[#allocation5 + $0xc0] sm:$0xff]
    %v67 = vld [vmem:[#allocation5 + $0xc8] sm:$0xff]
    %v68 = vld [vmem:[#allocation5 + $0xd0] sm:$0xff]
    %v69 = vld [vmem:[#allocation5 + $0xd8] sm:$0xff]
    %v70 = vld [vmem:[#allocation5 + $0xe0] sm:$0xff]
    %v71 = vld [vmem:[#allocation5 + $0xe8] sm:$0xff]
    %v72 = vld [vmem:[#allocation5 + $0xf0] sm:$0xff]
    %v73 = vld [vmem:[#allocation5 + $0xf8] sm:$0xff]
    %v74 = vld [vmem:[%s2] sm:$0x3]
    %v76 = vlaneseq
    %v77 = vshrl.u32 %v76, 7
    %v78 = vsub.s32 0, %v77
    %v79 = vrot.slane %v74, %v78
    %v80 = vlaneseq
    %v81 = vshrl.u32 %v80, 7
    %v82 = vsub.s32 1, %v81
    %v83 = vrot.slane %v74, %v82
    %86 = vmatprep.subr.mxu0 %v43
    %87 = vmatpush1.msra.mxu0 %v42
    %88 = vmatprep.subr.mxu0 %v45
    %89 = vmatpush1.msra.mxu0 %v44
    %90 = vmatprep.subr.mxu0 %v47
    %91 = vmatpush1.msra.mxu0 %v46
    %92 = vmatprep.subr.mxu0 %v49
    %93 = vmatpush1.msra.mxu0 %v48
    %94 = vmatprep.subr.mxu0 %v51
    %95 = vmatpush1.msra.mxu0 %v50
    %96 = vmatprep.subr.mxu0 %v53
    %97 = vmatpush1.msra.mxu0 %v52
    %98 = vmatprep.subr.mxu0 %v55
    %99 = vmatpush1.msra.mxu0 %v54
    %100 = vmatprep.subr.mxu0 %v57
    %101 = vmatpush1.msra.mxu0 %v56
    %102 = vmatprep.subr.mxu0 %v59
    %103 = vmatpush1.msra.mxu0 %v58
    %104 = vmatprep.subr.mxu0 %v61
    %105 = vmatpush1.msra.mxu0 %v60
    %106 = vmatprep.subr.mxu0 %v63
    %107 = vmatpush1.msra.mxu0 %v62
    %108 = vmatprep.subr.mxu0 %v65
    %109 = vmatpush1.msra.mxu0 %v64
    %110 = vmatprep.subr.mxu0 %v67
    %111 = vmatpush1.msra.mxu0 %v66
    %112 = vmatprep.subr.mxu0 %v69
    %113 = vmatpush1.msra.mxu0 %v68
    %114 = vmatprep.subr.mxu0 %v71
    %115 = vmatpush1.msra.mxu0 %v70
    %116 = vmatprep.subr.mxu0 %v73
    %117 = vmatpush1.msra.mxu0 %v72
    %118 = vmatprep.subr.mxu0 0.0
    %119 = vmatpush1.msra.mxu0 0.0
    %120 = vmatprep.subr.mxu0 0.0
    %121 = vmatpush1.msra.mxu0 0.0
    %122 = vmatprep.subr.mxu0 0.0
    %123 = vmatpush1.msra.mxu0 0.0
    %124 = vmatprep.subr.mxu0 0.0
    %125 = vmatpush1.msra.mxu0 0.0
    %126 = vmatprep.subr.mxu0 0.0
    %127 = vmatpush1.msra.mxu0 0.0
    %128 = vmatprep.subr.mxu0 0.0
    %129 = vmatpush1.msra.mxu0 0.0
    %130 = vmatprep.subr.mxu0 0.0
    %131 = vmatpush1.msra.mxu0 0.0
    %132 = vmatprep.subr.mxu0 0.0
    %133 = vmatpush1.msra.mxu0 0.0
    %134 = vmatprep.subr.mxu0 0.0
    %135 = vmatpush1.msra.mxu0 0.0
    %136 = vmatprep.subr.mxu0 0.0
    %137 = vmatpush1.msra.mxu0 0.0
    %138 = vmatprep.subr.mxu0 0.0
    %139 = vmatpush1.msra.mxu0 0.0
    %140 = vmatprep.subr.mxu0 0.0
    %141 = vmatpush1.msra.mxu0 0.0
    %142 = vmatprep.subr.mxu0 0.0
    %143 = vmatpush1.msra.mxu0 0.0
    %144 = vmatprep.subr.mxu0 0.0
    %145 = vmatpush1.msra.mxu0 0.0
    %146 = vmatprep.subr.mxu0 0.0
    %147 = vmatpush1.msra.mxu0 0.0
    %148 = vmatprep.subr.mxu0 0.0
    %149 = vmatpush1.msra.mxu0 0.0
    %150 = vmatprep.mubr.f32.mxu0 0.0
    %151 = vmatmul.mubr.f32.gmra.mrb[0].mxu0 %v41
    %v152 = vpop.f32.mrb[0].mxu0
    %v153 = vadd.f32 %v79, %v152
    %v154 = vpop.f32.mrb[0].mxu0
    %v155 = vadd.f32 %v83, %v154
    %156 = vdwg.mxu0
    %v159 = vcombine.low %v153, %v155
    %161 = vst [vmem:[#allocation7] sm:$0xff] %v159
    // Predicated region
    $region22: #{tpu_custom_call.1} parent=1 // pred_check
      _
    $region23: #{tpu_custom_call.1} parent=1 // pred_check_branch
      %163 = sbr.rel (0) target = $region25
    $region24: #{tpu_custom_call.1} parent=1 // pred_region
      %s165 = ssub.s32 128, 128
      %166 = vsyncadd [#allocation4], %s165
      %s168 = sshll.u32 [#allocation7], 4
      %s169 = int_to_ptr.vmem [resolvable:$true] %s168
      %171 = dma.vmem_to_hbm [thread:$0]  %s169, 128, %s3, [#allocation4]
    $region25: #{tpu_custom_call.1} parent=1 // pred_fallthru
      _
    // Predicated region
    $region26: #{tpu_custom_call.1} parent=1 // pred_check
      _
    $region27: #{tpu_custom_call.1} parent=1 // pred_check_branch
      %173 = sbr.rel (0) target = $region29
    $region28: #{tpu_custom_call.1} parent=1 // pred_region
      %174 = dma.done [#allocation4], 128
    $region29: #{tpu_custom_call.1} parent=1 // pred_fallthru
      _
    %175 = vsyncpa [#allocation3], 1
    %176 = vsyncpa [#allocation6], 1
    %177 = vsyncpa [#allocation4], 1

</llo_original>
